<compile_context>
chip_gen: v6e
topology: v6e:2x2x1
jax: 0.10.0
libtpu: 0.0.40
codegen_flags: <defaults>
</compile_context>

<pallas_src>
import functools
import math

import jax
import jax.numpy as jnp
from jax import lax
from jax.experimental import pallas as pl
from jax.experimental.pallas import tpu as pltpu


_LANE = 128      # lane width: last dims padded to multiples of this (lane-dense stores)
_SUBLANE = 16    # sublane granularity safe for both f32 (8) and bf16 (16)


def _round_up(x: int, m: int) -> int:
    return ((x + m - 1) // m) * m


def _cdiv(a: int, b: int) -> int:
    return -(-a // b)


def _vmem_capacity_bytes() -> int:
    """Generation-aware VMEM capacity (128 MiB v5e/v6e, 64 MiB per-TC v7x)."""
    try:
        return int(pltpu.get_tpu_info().vmem_capacity_bytes)
    except Exception:
        # Hardware query unavailable: fall back to the smallest generation so the
        # sizing is always safe.  (This except only guards an info query, never a
        # kernel compile.)
        return 64 << 20


def _gelu(x, approximate: bool):
    if approximate:
        # tanh GELU: transcendental goes to the EUP (its own VLIW slot).
        return jax.nn.gelu(x, approximate=True)
    # PyTorch nn.GELU() default: exact erf formulation.
    return 0.5 * x * (1.0 + lax.erf(x * (1.0 / math.sqrt(2.0))))


# --------------------------------------------------------------------------- #
# Kernels
# --------------------------------------------------------------------------- #

def _resident_kernel(x_ref, w1_ref, b1_ref, w2_ref, b2_ref, o_ref, *,
                     approximate_gelu: bool):
    """Both weight matrices VMEM-resident; one batch tile per grid step."""
    x = x_ref[...]
    h = jnp.dot(x, w1_ref[...], preferred_element_type=jnp.float32) + b1_ref[...]
    h = _gelu(h, approximate_gelu)
    # TODO(synk): training-time dropout (random mask) not implemented; eval-mode identity.
    y = jnp.dot(h.astype(w2_ref.dtype), w2_ref[...],
                preferred_element_type=jnp.float32) + b2_ref[...]
    o_ref[...] = jax.nn.sigmoid(y).astype(o_ref.dtype)


def _ktiled_kernel(x_ref, w1_ref, b1_ref, w2_ref, b2_ref, o_ref, acc_ref, *,
                   approximate_gelu: bool):
    """Reduction over the hidden dim in VMEM-sized chunks (for weights > VMEM)."""
    k = pl.program_id(1)

    @pl.when(k == 0)
    def _():
        acc_ref[...] = jnp.zeros_like(acc_ref)

    h = jnp.dot(x_ref[...], w1_ref[...],
                preferred_element_type=jnp.float32) + b1_ref[...]
    h = _gelu(h, approximate_gelu)
    acc_ref[...] += jnp.dot(h.astype(w2_ref.dtype), w2_ref[...],
                            preferred_element_type=jnp.float32)

    @pl.when(k == pl.num_programs(1) - 1)
    def _():
        o_ref[...] = jax.nn.sigmoid(acc_ref[...] + b2_ref[...]).astype(o_ref.dtype)


# --------------------------------------------------------------------------- #
# Parameter preparation (done ONCE, outside the per-call path)
# --------------------------------------------------------------------------- #

def prepare_params(w1, b1, w2, b2, scale, *, compute_dtype=jnp.bfloat16):
    """Pad feature dims to lane multiples, cast to the MXU dtype, and fold
    importance_scaling into W2/b2.  Call once at param-load time and reuse.

    Shapes: w1 [D_in, H] (pre-transposed), b1 [1, H] or [H],
            w2 [H, D_out] (pre-transposed), b2 [1, D_out] or [D_out],
            scale [1, D_out] or [D_out].
    """
    D_in, H = w1.shape
    D_out = w2.shape[1]
    din_p, h_p, dout_p = (_round_up(d, _LANE) for d in (D_in, H, D_out))
    cdt = jnp.dtype(compute_dtype)

    scale = jnp.asarray(scale, jnp.float32).reshape(1, D_out)
    w2f = jnp.asarray(w2, jnp.float32) * scale                     # fold scaling (free at runtime)
    b2f = jnp.asarray(b2, jnp.float32).reshape(1, D_out) * scale

    w1p = jnp.zeros((din_p, h_p), cdt).at[:D_in, :H].set(w1.astype(cdt))
    b1p = jnp.zeros((1, h_p), jnp.float32).at[:, :H].set(
        jnp.asarray(b1, jnp.float32).reshape(1, H))
    w2p = jnp.zeros((h_p, dout_p), cdt).at[:H, :D_out].set(w2f.astype(cdt))
    b2p = jnp.zeros((1, dout_p), jnp.float32).at[:, :D_out].set(b2f)

    return dict(w1=w1p, b1=b1p, w2=w2p, b2=b2p,
                dims=(D_in, H, D_out), padded=(din_p, h_p, dout_p),
                compute_dtype=cdt)


# --------------------------------------------------------------------------- #
# Forward wrapper
# --------------------------------------------------------------------------- #

def adaptive_encoding_forward(x, params, *, bm=512, hk=512, out_dtype=None,
                              approximate_gelu=False, force_k_tiling=False):
    """x: [B, D_in] -> [B, D_out].  `params` comes from prepare_params()."""
    D_in, H, D_out = params["dims"]
    din_p, h_p, dout_p = params["padded"]
    cdt = params["compute_dtype"]
    w1p, b1p, w2p, b2p = params["w1"], params["b1"], params["w2"], params["b2"]

    B = x.shape[0]
    assert x.shape[1] == D_in, f"expected x[:, {D_in}], got {x.shape}"

    out_dtype = jnp.dtype(out_dtype if out_dtype is not None else x.dtype)
    cbytes = cdt.itemsize
    obytes = out_dtype.itemsize

    # ---- batch tiling: large tiles amortize the ~0.35us/step overhead ----
    bm = max(_SUBLANE, _round_up(bm, _SUBLANE))
    bm_eff = min(bm, _round_up(B, _SUBLANE))          # don't over-pad tiny batches
    if _cdiv(B, bm_eff) == 1 and B > _SUBLANE:
        # v7x has 2 TensorCores: a single tile leaves one idle.  Split it.
        bm_eff = _round_up(_cdiv(B, 2), _SUBLANE)
    n_tiles = _cdiv(B, bm_eff)
    b_pad = n_tiles * bm_eff

    # ---- activations: skip the pad/copy entirely when already aligned ----
    if b_pad == B and din_p == D_in:
        xp = x.astype(cdt)
    else:
        xp = jnp.zeros((b_pad, din_p), cdt).at[:B, :D_in].set(x.astype(cdt))

    # ---- generation-aware VMEM budgeting ----
    cap = _vmem_capacity_bytes()
    budget = int(cap * 0.85)

    stream_bytes = 2 * bm_eff * (din_p * cbytes + dout_p * obytes)   # double-buffered x/out tiles
    w_bytes = (din_p * h_p + h_p * dout_p) * cbytes + (h_p + dout_p) * 4
    hidden_bytes = bm_eff * h_p * 4                                   # f32 fc1 intermediate

    if force_k_tiling:
        mode = "ktiled"
    elif stream_bytes + 2 * w_bytes + hidden_bytes <= budget:
        mode = "resident"            # default double-buffered resident weights (plenty of VMEM)
    elif stream_bytes + w_bytes + hidden_bytes <= budget and hasattr(pl, "Buffered"):
        mode = "resident_single"     # single-buffer the constant weight blocks (v7x VMEM relief)
    else:
        mode = "ktiled"              # weights don't fit: reduce over H in VMEM-sized chunks

    if mode in ("resident", "resident_single"):
        w_kwargs = {}
        w_copies = 2
        if mode == "resident_single":
            # Constant index_map => block never changes; double-buffering it is pure VMEM waste.
            w_kwargs = dict(pipeline_mode=pl.Buffered(1))
            w_copies = 1
        est = stream_bytes + w_copies * w_bytes + hidden_bytes
        vmem_limit = int(min(max(int(est * 1.3), 32 << 20), budget))
        kernel = functools.partial(_resident_kernel, approximate_gelu=approximate_gelu)
        # NOTE: if profiling ever shows exposed x-tile DMA (tiny H/D_out), bump the
        # x BlockSpec to pipeline_mode=pl.Buffered(3).
        out_p = pl.pallas_call(
            kernel,
            out_shape=jax.ShapeDtypeStruct((b_pad, dout_p), out_dtype),
            grid_spec=pltpu.PrefetchScalarGridSpec(
                num_scalar_prefetch=0,
                grid=(n_tiles,),
                in_specs=[
                    pl.BlockSpec((bm_eff, din_p), lambda i: (i, 0)),              # x (streamed)
                    pl.BlockSpec((din_p, h_p), lambda i: (0, 0), **w_kwargs),     # W1 (resident)
                    pl.BlockSpec((1, h_p), lambda i: (0, 0), **w_kwargs),         # b1
                    pl.BlockSpec((h_p, dout_p), lambda i: (0, 0), **w_kwargs),    # W2 (resident)
                    pl.BlockSpec((1, dout_p), lambda i: (0, 0), **w_kwargs),      # b2 (scale folded)
                ],
                out_specs=pl.BlockSpec((bm_eff, dout_p), lambda i: (i, 0)),
            ),
            compiler_params=pltpu.CompilerParams(
                dimension_semantics=("parallel",),
                vmem_limit_bytes=vmem_limit,
            ),
        )(xp, w1p, b1p, w2p, b2p)
    else:
        # K-tiled reduction over the hidden dim (GELU is elementwise, so fc1's
        # output can be produced/consumed chunk-by-chunk; fc2 accumulates in f32).
        hk_eff = min(max(_LANE, _round_up(hk, _LANE)), h_p)
        while h_p % hk_eff != 0:          # keep the grid even; terminates at 128
            hk_eff -= _LANE
        n_k = h_p // hk_eff
        est = (2 * bm_eff * din_p * cbytes + 2 * bm_eff * dout_p * obytes
               + 2 * (din_p * hk_eff + hk_eff * dout_p) * cbytes
               + 2 * (hk_eff + dout_p) * 4
               + bm_eff * dout_p * 4 + bm_eff * hk_eff * 4)
        vmem_limit = int(min(max(int(est * 1.3), 32 << 20), budget))
        kernel = functools.partial(_ktiled_kernel, approximate_gelu=approximate_gelu)
        out_p = pl.pallas_call(
            kernel,
            out_shape=jax.ShapeDtypeStruct((b_pad, dout_p), out_dtype),
            grid_spec=pltpu.PrefetchScalarGridSpec(
                num_scalar_prefetch=0,
                grid=(n_tiles, n_k),
                in_specs=[
                    pl.BlockSpec((bm_eff, din_p), lambda i, k: (i, 0)),   # x (constant over k)
                    pl.BlockSpec((din_p, hk_eff), lambda i, k: (0, k)),   # W1 column block
                    pl.BlockSpec((1, hk_eff), lambda i, k: (0, k)),       # b1 block
                    pl.BlockSpec((hk_eff, dout_p), lambda i, k: (k, 0)),  # W2 row block
                    pl.BlockSpec((1, dout_p), lambda i, k: (0, 0)),       # b2
                ],
                out_specs=pl.BlockSpec((bm_eff, dout_p), lambda i, k: (i, 0)),
                scratch_shapes=[pltpu.VMEM((bm_eff, dout_p), jnp.float32)],
            ),
            compiler_params=pltpu.CompilerParams(
                dimension_semantics=("parallel", "arbitrary"),
                vmem_limit_bytes=vmem_limit,
            ),
        )(xp, w1p, b1p, w2p, b2p)

    if b_pad == B and dout_p == D_out:
        return out_p
    return out_p[:B, :D_out]


# --------------------------------------------------------------------------- #
# Init + pure-JAX reference + self-test
# --------------------------------------------------------------------------- #

def init_params(key, input_dim, hidden_dim, output_dim):
    """Mirror the PyTorch module's __init__ (weights stored pre-transposed [in, out])."""
    k1, k2, kb1, kb2 = jax.random.split(key, 4)

    bound1 = math.sqrt(6.0 / (input_dim + hidden_dim))               # xavier_uniform
    w1 = jax.random.uniform(k1, (input_dim, hidden_dim), jnp.float32, -bound1, bound1)
    bb1 = 1.0 / math.sqrt(input_dim)                                 # PyTorch Linear bias default
    b1 = jax.random.uniform(kb1, (1, hidden_dim), jnp.float32, -bb1, bb1)

    if input_dim == output_dim:
        # torch.nn.init.eye_(fc2.weight) on [out, hidden] -> transposed eye(hidden, out)
        w2 = jnp.eye(hidden_dim, output_dim, dtype=jnp.float32)
        b2 = jnp.zeros((1, output_dim), jnp.float32)
    else:
        bound2 = math.sqrt(6.0 / (hidden_dim + output_dim))
        w2 = jax.random.uniform(k2, (hidden_dim, output_dim), jnp.float32, -bound2, bound2)
        bb2 = 1.0 / math.sqrt(hidden_dim)
        b2 = jax.random.uniform(kb2, (1, output_dim), jnp.float32, -bb2, bb2)

    scale = jnp.ones((1, output_dim), jnp.float32)                   # importance_scaling = ones
    return w1, b1, w2, b2, scale


def reference_forward(x, w1, b1, w2, b2, scale):
    h = jnp.dot(x, w1) + b1
    h = 0.5 * h * (1.0 + lax.erf(h / math.sqrt(2.0)))                # exact GELU (PyTorch default)
    y = jnp.dot(h, w2) + b2
    return jax.nn.sigmoid(y * scale)


if __name__ == "__main__":
    key = jax.random.PRNGKey(0)
    k_x, k_p = jax.random.split(key)

    # Small, deliberately non-aligned shapes (exercise padding + cdiv paths).
    batch, input_dim, hidden_dim, output_dim = 10, 48, 200, 32
    x = jax.random.normal(k_x, (batch, input_dim), jnp.float32)
    w1, b1, w2, b2, scale = init_params(k_p, input_dim, hidden_dim, output_dim)
    ref = reference_forward(x, w1, b1, w2, b2, scale)

    # f32 operand path, resident weights: near bit-exact vs the pure-JAX reference.
    p_f32 = prepare_params(w1, b1, w2, b2, scale, compute_dtype=jnp.float32)
    out_f32 = jax.block_until_ready(adaptive_encoding_forward(x, p_f32))
    assert out_f32.shape == (batch, output_dim)
    assert jnp.allclose(out_f32, ref, atol=1e-5, rtol=1e-5), "f32 kernel mismatch vs reference"

    # Forced K-tiled path (the v7x large-H variant), f32, exact check (n_k = 2 here).
    out_kt = jax.block_until_ready(
        adaptive_encoding_forward(x, p_f32, force_k_tiling=True, hk=128))
    assert out_kt.shape == (batch, output_dim)
    assert jnp.allclose(out_kt, ref, atol=1e-5, rtol=1e-5), "K-tiled kernel mismatch vs reference"

    # bf16 MXU path with bf16 output writeback: looser tolerance.
    p_bf16 = prepare_params(w1, b1, w2, b2, scale, compute_dtype=jnp.bfloat16)
    out_bf16 = jax.block_until_ready(
        adaptive_encoding_forward(x, p_bf16, out_dtype=jnp.bfloat16))
    assert out_bf16.shape == (batch, output_dim)
    assert jnp.allclose(out_bf16.astype(jnp.float32), ref, atol=2e-2, rtol=2e-2), \
        "bf16 kernel mismatch vs reference"

    print("KERNEL_OK")
</pallas_src>

<mosaic_0001>
module attributes {stable_mosaic.version = 11 : i64} {
  func.func @_resident_kernel(%arg0: i32, %arg1: memref<16x128xf32, #tpu.memory_space<vmem>>, %arg2: memref<128x256xf32, #tpu.memory_space<vmem>>, %arg3: memref<1x256xf32, #tpu.memory_space<vmem>>, %arg4: memref<256x128xf32, #tpu.memory_space<vmem>>, %arg5: memref<1x128xf32, #tpu.memory_space<vmem>>, %arg6: memref<16x128xf32, #tpu.memory_space<vmem>>) attributes {dimension_semantics = [#tpu.dimension_semantics<parallel>], iteration_bounds = array<i64: 1>, scalar_prefetch = 0 : i64, scratch_operands = 0 : i64, tpu.core_type = #tpu.core_type<tc>, window_params = [{transform_indices = @transform_0, window_bounds = array<i64: 16, 128>}, {pipeline_mode = #tpu.pipeline_mode<synchronous>, transform_indices = @transform_1, window_bounds = array<i64: 128, 256>}, {pipeline_mode = #tpu.pipeline_mode<synchronous>, transform_indices = @transform_2, window_bounds = array<i64: 1, 256>}, {pipeline_mode = #tpu.pipeline_mode<synchronous>, transform_indices = @transform_3, window_bounds = array<i64: 256, 128>}, {pipeline_mode = #tpu.pipeline_mode<synchronous>, transform_indices = @transform_4, window_bounds = array<i64: 1, 128>}, {transform_indices = @transform_5, window_bounds = array<i64: 16, 128>}]} {
    %c0 = arith.constant 0 : index
    %c0_0 = arith.constant 0 : index
    %0 = vector.load %arg1[%c0, %c0_0] : memref<16x128xf32, #tpu.memory_space<vmem>>, vector<16x128xf32>
    %c0_1 = arith.constant 0 : index
    %c0_2 = arith.constant 0 : index
    %1 = vector.load %arg2[%c0_1, %c0_2] : memref<128x256xf32, #tpu.memory_space<vmem>>, vector<128x256xf32>
    %cst = arith.constant dense<0.000000e+00> : vector<16x256xf32>
    %2 = tpu.matmul %0, %1, %cst {dimension_numbers = #tpu.dot_dimension_numbers<[1], [0], [0], [1], [0, 0, 1, 1], [], []>} : vector<16x128xf32>, vector<128x256xf32>, vector<16x256xf32> -> vector<16x256xf32>
    %c0_3 = arith.constant 0 : index
    %c0_4 = arith.constant 0 : index
    %3 = vector.load %arg3[%c0_3, %c0_4] : memref<1x256xf32, #tpu.memory_space<vmem>>, vector<1x256xf32>
    %4 = vector.broadcast %3 : vector<1x256xf32> to vector<16x256xf32>
    %5 = arith.addf %2, %4 : vector<16x256xf32>
    %cst_5 = arith.constant 5.000000e-01 : f32
    %6 = vector.broadcast %cst_5 : f32 to vector<16x256xf32>
    %7 = arith.mulf %6, %5 : vector<16x256xf32>
    %cst_6 = arith.constant 0.707106769 : f32
    %8 = vector.broadcast %cst_6 : f32 to vector<16x256xf32>
    %9 = arith.mulf %5, %8 : vector<16x256xf32>
    %10 = math.erf %9 : vector<16x256xf32>
    %cst_7 = arith.constant 1.000000e+00 : f32
    %11 = vector.broadcast %cst_7 : f32 to vector<16x256xf32>
    %12 = arith.addf %11, %10 : vector<16x256xf32>
    %13 = arith.mulf %7, %12 : vector<16x256xf32>
    %c0_8 = arith.constant 0 : index
    %c0_9 = arith.constant 0 : index
    %14 = vector.load %arg4[%c0_8, %c0_9] : memref<256x128xf32, #tpu.memory_space<vmem>>, vector<256x128xf32>
    %cst_10 = arith.constant dense<0.000000e+00> : vector<16x128xf32>
    %15 = tpu.matmul %13, %14, %cst_10 {dimension_numbers = #tpu.dot_dimension_numbers<[1], [0], [0], [1], [0, 0, 1, 1], [], []>} : vector<16x256xf32>, vector<256x128xf32>, vector<16x128xf32> -> vector<16x128xf32>
    %c0_11 = arith.constant 0 : index
    %c0_12 = arith.constant 0 : index
    %16 = vector.load %arg5[%c0_11, %c0_12] : memref<1x128xf32, #tpu.memory_space<vmem>>, vector<1x128xf32>
    %17 = vector.broadcast %16 : vector<1x128xf32> to vector<16x128xf32>
    %18 = arith.addf %15, %17 : vector<16x128xf32>
    %19 = arith.negf %18 : vector<16x128xf32>
    %20 = math.exp %19 : vector<16x128xf32>
    %cst_13 = arith.constant 1.000000e+00 : f32
    %21 = vector.broadcast %cst_13 : f32 to vector<16x128xf32>
    %22 = arith.addf %21, %20 : vector<16x128xf32>
    %23 = arith.divf %21, %22 : vector<16x128xf32>
    %c0_14 = arith.constant 0 : index
    %c0_15 = arith.constant 0 : index
    %24 = vector.load %arg6[%c0_14, %c0_15] : memref<16x128xf32, #tpu.memory_space<vmem>>, vector<16x128xf32>
    tpu.vector_store %arg6[%c0_14, %c0_15], %23 {strides = array<i32>} : memref<16x128xf32, #tpu.memory_space<vmem>>, vector<16x128xf32>,
    return
  }
  func.func @transform_0(%arg0: i32) -> (i32, i32) {
    %c0_i32 = arith.constant 0 : i32
    %c0_i32_0 = arith.constant 0 : i32
    return %arg0, %c0_i32 : i32, i32
  }
  func.func @transform_1(%arg0: i32) -> (i32, i32) {
    %c0_i32 = arith.constant 0 : i32
    %c0_i32_0 = arith.constant 0 : i32
    %c0_i32_1 = arith.constant 0 : i32
    return %c0_i32, %c0_i32_0 : i32, i32
  }
  func.func @transform_2(%arg0: i32) -> (i32, i32) {
    %c0_i32 = arith.constant 0 : i32
    %c0_i32_0 = arith.constant 0 : i32
    %c0_i32_1 = arith.constant 0 : i32
    return %c0_i32, %c0_i32_0 : i32, i32
  }
  func.func @transform_3(%arg0: i32) -> (i32, i32) {
    %c0_i32 = arith.constant 0 : i32
    %c0_i32_0 = arith.constant 0 : i32
    %c0_i32_1 = arith.constant 0 : i32
    return %c0_i32, %c0_i32_0 : i32, i32
  }
  func.func @transform_4(%arg0: i32) -> (i32, i32) {
    %c0_i32 = arith.constant 0 : i32
    %c0_i32_0 = arith.constant 0 : i32
    %c0_i32_1 = arith.constant 0 : i32
    return %c0_i32, %c0_i32_0 : i32, i32
  }
  func.func @transform_5(%arg0: i32) -> (i32, i32) {
    %c0_i32 = arith.constant 0 : i32
    %c0_i32_0 = arith.constant 0 : i32
    return %arg0, %c0_i32 : i32, i32
  }
}

</mosaic_0001>

<llo_original>
// kernel: tpu_custom_call.1
$region0: #{tpu_custom_call.1}
  #allocation0 [shape = 'u32[]', space=smem, size = 0x4, offset = 0x4, fixed_abs, tag = 'smem constant byte address 0x4 - core index']
  #allocation1 [shape = 'u32[144,128]{1,0:T(1,128)}', space=vmem, size = 0x12000, scoped, tag = 'internal scratch']
  %s0 = inlined_call_operand.hbm [shape: f32[16,128], index: 0, kind: input, shape index: {}]
  %s1 = inlined_call_operand.hbm [shape: f32[128,256], index: 1, kind: input, shape index: {}]
  %s2 = inlined_call_operand.vmem [shape: f32[1,256], index: 2, kind: input, shape index: {}]
  %s3 = inlined_call_operand.hbm [shape: f32[256,128], index: 3, kind: input, shape index: {}]
  %s4 = inlined_call_operand.vmem [shape: f32[1,128], index: 4, kind: input, shape index: {}]
  %s5 = inlined_call_operand.hbm [shape: f32[16,128], index: 5, kind: output, shape index: {}]
  %s6 = sld [smem:[#allocation0]]
  $region42: #{tpu_custom_call.1} parent=0
    _
  %s8 = ssub.s32 1, %s6
  %s9 = scalar_select 0, %s8, %s6
  $region1: #{tpu_custom_call.1} parent=0
    #allocation2 [shape = 'u8[8192]{0}', space=vmem, size = 0x2000, scoped, tag = 'input window, operand 0, single buffered']
    #allocation3 [shape = 's32[1]{0}', space=sflag, size = 0x4, scoped, tag = 'scoped memory for tpu_custom_call.1']
    #allocation4 [shape = 's32[1]{0}', space=sflag, size = 0x4, scoped, tag = 'scoped memory for tpu_custom_call.1']
    #allocation5 [shape = 'u8[131072]{0}', space=vmem, size = 0x20000, scoped, tag = 'input window, operand 1, single buffered']
    #allocation6 [shape = 's32[1]{0}', space=sflag, size = 0x4, scoped, tag = 'scoped memory for tpu_custom_call.1']
    #allocation7 [shape = 'u8[131072]{0}', space=vmem, size = 0x20000, scoped, tag = 'input window, operand 3, single buffered']
    #allocation8 [shape = 'u8[8192]{0}', space=vmem, size = 0x2000, scoped, tag = 'output window, operand 0, single buffered']
    %10 = vsyncpa [#allocation3], 0
    %11 = vsyncpa [#allocation6], 0
    %12 = vsyncpa [#allocation4], 0
    // Predicated region
    $region2: #{tpu_custom_call.1} parent=1 // pred_check
      _
    $region3: #{tpu_custom_call.1} parent=1 // pred_check_branch
      %14 = sbr.rel (0) target = $region5
    $region4: #{tpu_custom_call.1} parent=1 // pred_region
      %s16 = ssub.s32 256, 256
      %17 = vsyncadd [#allocation3], %s16
      %s18 = sshll.u32 [#allocation2], 4
      %s19 = int_to_ptr.vmem [resolvable:$true] %s18
      %24 = dma.hbm_to_vmem [thread:$0]  %s0, 256, %s19, [#allocation3], 128, 128, 8
    $region5: #{tpu_custom_call.1} parent=1 // pred_fallthru
      _
    // Predicated region
    $region6: #{tpu_custom_call.1} parent=1 // pred_check
      _
    $region7: #{tpu_custom_call.1} parent=1 // pred_check_branch
      %26 = sbr.rel (0) target = $region9
    $region8: #{tpu_custom_call.1} parent=1 // pred_region
      %s28 = ssub.s32 4096, 4096
      %29 = vsyncadd [#allocation6], %s28
      %s30 = sshll.u32 [#allocation5], 4
      %s31 = int_to_ptr.vmem [resolvable:$true] %s30
      %36 = dma.hbm_to_vmem [thread:$0]  %s1, 4096, %s31, [#allocation6], 256, 256, 16
    $region9: #{tpu_custom_call.1} parent=1 // pred_fallthru
      _
    // Predicated region
    $region10: #{tpu_custom_call.1} parent=1 // pred_check
      _
    $region11: #{tpu_custom_call.1} parent=1 // pred_check_branch
      %38 = sbr.rel (0) target = $region13
    $region12: #{tpu_custom_call.1} parent=1 // pred_region
      _
    $region13: #{tpu_custom_call.1} parent=1 // pred_fallthru
      _
    // Predicated region
    $region14: #{tpu_custom_call.1} parent=1 // pred_check
      _
    $region15: #{tpu_custom_call.1} parent=1 // pred_check_branch
      %40 = sbr.rel (0) target = $region17
    $region16: #{tpu_custom_call.1} parent=1 // pred_region
      %s42 = ssub.s32 4096, 4096
      %43 = vsyncadd [#allocation6], %s42
      %s44 = sshll.u32 [#allocation7], 4
      %s45 = int_to_ptr.vmem [resolvable:$true] %s44
      %50 = dma.hbm_to_vmem [thread:$0]  %s3, 4096, %s45, [#allocation6], 128, 128, 8
    $region17: #{tpu_custom_call.1} parent=1 // pred_fallthru
      _
    // Predicated region
    $region18: #{tpu_custom_call.1} parent=1 // pred_check
      _
    $region19: #{tpu_custom_call.1} parent=1 // pred_check_branch
      %52 = sbr.rel (0) target = $region21
    $region20: #{tpu_custom_call.1} parent=1 // pred_region
      _
    $region21: #{tpu_custom_call.1} parent=1 // pred_fallthru
      _
    // Predicated region
    $region22: #{tpu_custom_call.1} parent=1 // pred_check
      _
    $region23: #{tpu_custom_call.1} parent=1 // pred_check_branch
      %54 = sbr.rel (0) target = $region25
    $region24: #{tpu_custom_call.1} parent=1 // pred_region
      %55 = dma.done [#allocation3], 256
    $region25: #{tpu_custom_call.1} parent=1 // pred_fallthru
      _
    // Predicated region
    $region26: #{tpu_custom_call.1} parent=1 // pred_check
      _
    $region27: #{tpu_custom_call.1} parent=1 // pred_check_branch
      %57 = sbr.rel (0) target = $region29
    $region28: #{tpu_custom_call.1} parent=1 // pred_region
      %58 = dma.done [#allocation6], 4096
    $region29: #{tpu_custom_call.1} parent=1 // pred_fallthru
      _
    // Predicated region
    $region30: #{tpu_custom_call.1} parent=1 // pred_check
      _
    $region31: #{tpu_custom_call.1} parent=1 // pred_check_branch
      %60 = sbr.rel (0) target = $region33
    $region32: #{tpu_custom_call.1} parent=1 // pred_region
      %61 = dma.done [#allocation6], 4096
    $region33: #{tpu_custom_call.1} parent=1 // pred_fallthru
      _
    %v62 = vld [vmem:[#allocation2] sm:$0xff]
    %v63 = vld [vmem:[#allocation2 + $0x8] sm:$0xff]
    %v64 = vld [vmem:[#allocation5] sm:$0xff]
    %v65 = vld [vmem:[#allocation5 + $0x8] sm:$0xff]
    %v66 = vld [vmem:[#allocation5 + $0x10] sm:$0xff]
    %v67 = vld [vmem:[#allocation5 + $0x18] sm:$0xff]
    %v68 = vld [vmem:[#allocation5 + $0x20] sm:$0xff]
    %v69 = vld [vmem:[#allocation5 + $0x28] sm:$0xff]
    %v70 = vld [vmem:[#allocation5 + $0x30] sm:$0xff]
    %v71 = vld [vmem:[#allocation5 + $0x38] sm:$0xff]
    %v72 = vld [vmem:[#allocation5 + $0x40] sm:$0xff]
    %v73 = vld [vmem:[#allocation5 + $0x48] sm:$0xff]
    %v74 = vld [vmem:[#allocation5 + $0x50] sm:$0xff]
    %v75 = vld [vmem:[#allocation5 + $0x58] sm:$0xff]
    %v76 = vld [vmem:[#allocation5 + $0x60] sm:$0xff]
    %v77 = vld [vmem:[#allocation5 + $0x68] sm:$0xff]
    %v78 = vld [vmem:[#allocation5 + $0x70] sm:$0xff]
    %v79 = vld [vmem:[#allocation5 + $0x78] sm:$0xff]
    %v80 = vld [vmem:[#allocation5 + $0x80] sm:$0xff]
    %v81 = vld [vmem:[#allocation5 + $0x88] sm:$0xff]
    %v82 = vld [vmem:[#allocation5 + $0x90] sm:$0xff]
    %v83 = vld [vmem:[#allocation5 + $0x98] sm:$0xff]
    %v84 = vld [vmem:[#allocation5 + $0xa0] sm:$0xff]
    %v85 = vld [vmem:[#allocation5 + $0xa8] sm:$0xff]
    %v86 = vld [vmem:[#allocation5 + $0xb0] sm:$0xff]
    %v87 = vld [vmem:[#allocation5 + $0xb8] sm:$0xff]
    %v88 = vld [vmem:[#allocation5 + $0xc0] sm:$0xff]
    %v89 = vld [vmem:[#allocation5 + $0xc8] sm:$0xff]
    %v90 = vld [vmem:[#allocation5 + $0xd0] sm:$0xff]
    %v91 = vld [vmem:[#allocation5 + $0xd8] sm:$0xff]
    %v92 = vld [vmem:[#allocation5 + $0xe0] sm:$0xff]
    %v93 = vld [vmem:[#allocation5 + $0xe8] sm:$0xff]
    %v94 = vld [vmem:[#allocation5 + $0xf0] sm:$0xff]
    %v95 = vld [vmem:[#allocation5 + $0xf8] sm:$0xff]
    %v96 = vld [vmem:[%s2] sm:$0x3]
    %v98 = vlaneseq
    %v99 = vshrl.u32 %v98, 7
    %v100 = vsub.s32 0, %v99
    %v101 = vrot.slane %v96, %v100
    %v102 = vlaneseq
    %v103 = vshrl.u32 %v102, 7
    %v104 = vsub.s32 1, %v103
    %v105 = vrot.slane %v96, %v104
    %108 = vmatprep.subr.mxu0 %v95
    %109 = vmatpush1.msra.mxu0 %v94
    %110 = vmatprep.subr.mxu0 %v93
    %111 = vmatpush1.msra.mxu0 %v92
    %112 = vmatprep.subr.mxu0 %v91
    %113 = vmatpush1.msra.mxu0 %v90
    %114 = vmatprep.subr.mxu0 %v89
    %115 = vmatpush1.msra.mxu0 %v88
    %116 = vmatprep.subr.mxu0 %v87
    %117 = vmatpush1.msra.mxu0 %v86
    %118 = vmatprep.subr.mxu0 %v85
    %119 = vmatpush1.msra.mxu0 %v84
    %120 = vmatprep.subr.mxu0 %v83
    %121 = vmatpush1.msra.mxu0 %v82
    %122 = vmatprep.subr.mxu0 %v81
    %123 = vmatpush1.msra.mxu0 %v80
    %124 = vmatprep.subr.mxu0 %v79
    %125 = vmatpush1.msra.mxu0 %v78
    %126 = vmatprep.subr.mxu0 %v77
    %127 = vmatpush1.msra.mxu0 %v76
    %128 = vmatprep.subr.mxu0 %v75
    %129 = vmatpush1.msra.mxu0 %v74
    %130 = vmatprep.subr.mxu0 %v73
    %131 = vmatpush1.msra.mxu0 %v72
    %132 = vmatprep.subr.mxu0 %v71
    %133 = vmatpush1.msra.mxu0 %v70
    %134 = vmatprep.subr.mxu0 %v69
    %135 = vmatpush1.msra.mxu0 %v68
    %136 = vmatprep.subr.mxu0 %v67
    %137 = vmatpush1.msra.mxu0 %v66
    %138 = vmatprep.subr.mxu0 %v65
    %139 = vmatpush1.msra.mxu0 %v64
    %140 = vmatprep.subr.mxu0 0.0
    %141 = vmatpush2.msra.mxu0 0.0
    %142 = vmatprep.subr.mxu0 0.0
    %143 = vmatpush2.msra.mxu0 0.0
    %144 = vmatprep.subr.mxu0 0.0
    %145 = vmatpush2.msra.mxu0 0.0
    %146 = vmatprep.subr.mxu0 0.0
    %147 = vmatpush2.msra.mxu0 0.0
    %148 = vmatprep.subr.mxu0 0.0
    %149 = vmatpush2.msra.mxu0 0.0
    %150 = vmatprep.subr.mxu0 0.0
    %151 = vmatpush2.msra.mxu0 0.0
    %152 = vmatprep.subr.mxu0 0.0
    %153 = vmatpush2.msra.mxu0 0.0
    %154 = vmatprep.subr.mxu0 0.0
    %155 = vmatpush2.msra.mxu0 0.0
    %156 = vmatprep.subr.mxu0 0.0
    %157 = vmatpush2.msra.mxu0 0.0
    %158 = vmatprep.subr.mxu0 0.0
    %159 = vmatpush2.msra.mxu0 0.0
    %160 = vmatprep.subr.mxu0 0.0
    %161 = vmatpush2.msra.mxu0 0.0
    %162 = vmatprep.subr.mxu0 0.0
    %163 = vmatpush2.msra.mxu0 0.0
    %164 = vmatprep.subr.mxu0 0.0
    %165 = vmatpush2.msra.mxu0 0.0
    %166 = vmatprep.subr.mxu0 0.0
    %167 = vmatpush2.msra.mxu0 0.0
    %168 = vmatprep.subr.mxu0 0.0
    %169 = vmatpush2.msra.mxu0 0.0
    %170 = vmatprep.subr.mxu0 0.0
    %171 = vmatpush2.msra.mxu0 0.0
    %172 = vmatprep.mubr.f32.mxu0 0.0
    %173 = vmatmul.mubr.f32.gmra.mxu0 %v62
    %v174 = vpop.f32.mrf.mxu0
    %v175 = vadd.f32 %v101, %v174
    %v176 = vpop.f32.mrf.mxu0
    %v177 = vadd.f32 %v105, %v176
    %178 = vmatprep.mubr.f32.mxu0 0.0
    %179 = vmatmul.mubr.f32.gmra.mxu0 %v63
    %v180 = vpop.f32.mrf.mxu0
    %v181 = vadd.f32 %v101, %v180
    %v182 = vpop.f32.mrf.mxu0
    %v183 = vadd.f32 %v105, %v182
    %184 = vdwg.mxu0
    %v185 = vmul.f32 %v175, 0.5
    %v186 = vmul.f32 %v177, 0.5
    %v187 = vmul.f32 %v181, 0.5
    %v188 = vmul.f32 %v183, 0.5
    %v189 = vmul.f32 %v175, 0.70710677
    %v190 = vmul.f32 %v177, 0.70710677
    %v191 = vmul.f32 %v181, 0.70710677
    %v192 = vmul.f32 %v183, 0.70710677
    %v193 = verf.f32.pop %v189
    %v194 = verf.f32.pop %v190
    %v195 = verf.f32.pop %v191
    %v196 = verf.f32.pop %v192
    %v197 = vadd.f32 %v193, 1.0
    %v198 = vadd.f32 %v194, 1.0
    %v199 = vadd.f32 %v195, 1.0
    %v200 = vadd.f32 %v196, 1.0
    %v201 = vmul.f32 %v185, %v197
    %v202 = vmul.f32 %v186, %v198
    %v203 = vmul.f32 %v187, %v199
    %v204 = vmul.f32 %v188, %v200
    %v205 = vld [vmem:[#allocation7] sm:$0xff]
    %v206 = vld [vmem:[#allocation7 + $0x8] sm:$0xff]
    %v207 = vld [vmem:[#allocation7 + $0x10] sm:$0xff]
    %v208 = vld [vmem:[#allocation7 + $0x18] sm:$0xff]
    %v209 = vld [vmem:[#allocation7 + $0x20] sm:$0xff]
    %v210 = vld [vmem:[#allocation7 + $0x28] sm:$0xff]
    %v211 = vld [vmem:[#allocation7 + $0x30] sm:$0xff]
    %v212 = vld [vmem:[#allocation7 + $0x38] sm:$0xff]
    %v213 = vld [vmem:[#allocation7 + $0x40] sm:$0xff]
    %v214 = vld [vmem:[#allocation7 + $0x48] sm:$0xff]
    %v215 = vld [vmem:[#allocation7 + $0x50] sm:$0xff]
    %v216 = vld [vmem:[#allocation7 + $0x58] sm:$0xff]
    %v217 = vld [vmem:[#allocation7 + $0x60] sm:$0xff]
    %v218 = vld [vmem:[#allocation7 + $0x68] sm:$0xff]
    %v219 = vld [vmem:[#allocation7 + $0x70] sm:$0xff]
    %v220 = vld [vmem:[#allocation7 + $0x78] sm:$0xff]
    %v221 = vld [vmem:[#allocation7 + $0x80] sm:$0xff]
    %v222 = vld [vmem:[#allocation7 + $0x88] sm:$0xff]
    %v223 = vld [vmem:[#allocation7 + $0x90] sm:$0xff]
    %v224 = vld [vmem:[#allocation7 + $0x98] sm:$0xff]
    %v225 = vld [vmem:[#allocation7 + $0xa0] sm:$0xff]
    %v226 = vld [vmem:[#allocation7 + $0xa8] sm:$0xff]
    %v227 = vld [vmem:[#allocation7 + $0xb0] sm:$0xff]
    %v228 = vld [vmem:[#allocation7 + $0xb8] sm:$0xff]
    %v229 = vld [vmem:[#allocation7 + $0xc0] sm:$0xff]
    %v230 = vld [vmem:[#allocation7 + $0xc8] sm:$0xff]
    %v231 = vld [vmem:[#allocation7 + $0xd0] sm:$0xff]
    %v232 = vld [vmem:[#allocation7 + $0xd8] sm:$0xff]
    %v233 = vld [vmem:[#allocation7 + $0xe0] sm:$0xff]
    %v234 = vld [vmem:[#allocation7 + $0xe8] sm:$0xff]
    %v235 = vld [vmem:[#allocation7 + $0xf0] sm:$0xff]
    %v236 = vld [vmem:[#allocation7 + $0xf8] sm:$0xff]
    %v237 = vld [vmem:[%s4] sm:$0x1]
    %v239 = vlaneseq
    %v240 = vshrl.u32 %v239, 7
    %v241 = vsub.s32 0, %v240
    %v242 = vrot.slane %v237, %v241
    %244 = vmatprep.subr.mxu0 0.0
    %245 = vmatpush1.msra.mxu0 %v220
    %246 = vmatprep.subr.mxu0 0.0
    %247 = vmatpush1.msra.mxu0 %v219
    %248 = vmatprep.subr.mxu0 0.0
    %249 = vmatpush1.msra.mxu0 %v218
    %250 = vmatprep.subr.mxu0 0.0
    %251 = vmatpush1.msra.mxu0 %v217
    %252 = vmatprep.subr.mxu0 0.0
    %253 = vmatpush1.msra.mxu0 %v216
    %254 = vmatprep.subr.mxu0 0.0
    %255 = vmatpush1.msra.mxu0 %v215
    %256 = vmatprep.subr.mxu0 0.0
    %257 = vmatpush1.msra.mxu0 %v214
    %258 = vmatprep.subr.mxu0 0.0
    %259 = vmatpush1.msra.mxu0 %v213
    %260 = vmatprep.subr.mxu0 0.0
    %261 = vmatpush1.msra.mxu0 %v212
    %262 = vmatprep.subr.mxu0 0.0
    %263 = vmatpush1.msra.mxu0 %v211
    %264 = vmatprep.subr.mxu0 0.0
    %265 = vmatpush1.msra.mxu0 %v210
    %266 = vmatprep.subr.mxu0 0.0
    %267 = vmatpush1.msra.mxu0 %v209
    %268 = vmatprep.subr.mxu0 0.0
    %269 = vmatpush1.msra.mxu0 %v208
    %270 = vmatprep.subr.mxu0 0.0
    %271 = vmatpush1.msra.mxu0 %v207
    %272 = vmatprep.subr.mxu0 0.0
    %273 = vmatpush1.msra.mxu0 %v206
    %274 = vmatprep.subr.mxu0 0.0
    %275 = vmatpush1.msra.mxu0 %v205
    %276 = vmatprep.subr.mxu0 0.0
    %277 = vmatpush2.msra.mxu0 %v236
    %278 = vmatprep.subr.mxu0 0.0
    %279 = vmatpush2.msra.mxu0 %v235
    %280 = vmatprep.subr.mxu0 0.0
    %281 = vmatpush2.msra.mxu0 %v234
    %282 = vmatprep.subr.mxu0 0.0
    %283 = vmatpush2.msra.mxu0 %v233
    %284 = vmatprep.subr.mxu0 0.0
    %285 = vmatpush2.msra.mxu0 %v232
    %286 = vmatprep.subr.mxu0 0.0
    %287 = vmatpush2.msra.mxu0 %v231
    %288 = vmatprep.subr.mxu0 0.0
    %289 = vmatpush2.msra.mxu0 %v230
    %290 = vmatprep.subr.mxu0 0.0
    %291 = vmatpush2.msra.mxu0 %v229
    %292 = vmatprep.subr.mxu0 0.0
    %293 = vmatpush2.msra.mxu0 %v228
    %294 = vmatprep.subr.mxu0 0.0
    %295 = vmatpush2.msra.mxu0 %v227
    %296 = vmatprep.subr.mxu0 0.0
    %297 = vmatpush2.msra.mxu0 %v226
    %298 = vmatprep.subr.mxu0 0.0
    %299 = vmatpush2.msra.mxu0 %v225
    %300 = vmatprep.subr.mxu0 0.0
    %301 = vmatpush2.msra.mxu0 %v224
    %302 = vmatprep.subr.mxu0 0.0
    %303 = vmatpush2.msra.mxu0 %v223
    %304 = vmatprep.subr.mxu0 0.0
    %305 = vmatpush2.msra.mxu0 %v222
    %306 = vmatprep.subr.mxu0 0.0
    %307 = vmatpush2.msra.mxu0 %v221
    %308 = vmatprep.mubr.f32.mxu0 %v202
    %309 = vmatmul.mubr.f32.gmra.mxu0 %v201
    %v310 = vpop.f32.mrf.mxu0
    %v311 = vadd.f32 %v242, %v310
    %v312 = vpop.f32.mrf.mxu0
    %313 = vmatprep.mubr.f32.mxu0 %v204
    %314 = vmatmul.mubr.f32.gmra.mxu0 %v203
    %v315 = vpop.f32.mrf.mxu0
    %v316 = vadd.f32 %v242, %v315
    %v317 = vpop.f32.mrf.mxu0
    %318 = vdwg.mxu0
    %v319 = vxor.u32 %v311, 2147483648
    %v320 = vxor.u32 %v316, 2147483648
    %v321 = vmul.f32 %v319, 1.442695
    %v322 = vpow.pop %v321
    %v323 = vmul.f32 %v320, 1.442695
    %v324 = vpow.pop %v323
    %v325 = vadd.f32 %v322, 1.0
    %v326 = vadd.f32 %v324, 1.0
    %v327 = vrcp.pop %v325
    %v328 = vmul.f32 1.0, %v327
    %v329 = vrcp.pop %v326
    %v330 = vmul.f32 1.0, %v329
    %331 = vst [vmem:[#allocation8] sm:$0xff] %v328
    %332 = vst [vmem:[#allocation8 + $0x8] sm:$0xff] %v330
    // Predicated region
    $region34: #{tpu_custom_call.1} parent=1 // pred_check
      _
    $region35: #{tpu_custom_call.1} parent=1 // pred_check_branch
      %334 = sbr.rel (0) target = $region37
    $region36: #{tpu_custom_call.1} parent=1 // pred_region
      %s336 = ssub.s32 256, 256
      %337 = vsyncadd [#allocation4], %s336
      %s338 = sshll.u32 [#allocation8], 4
      %s339 = int_to_ptr.vmem [resolvable:$true] %s338
      %344 = dma.vmem_to_hbm [thread:$0]  %s339, 256, %s5, [#allocation4], 128, 128, 8
    $region37: #{tpu_custom_call.1} parent=1 // pred_fallthru
      _
    // Predicated region
    $region38: #{tpu_custom_call.1} parent=1 // pred_check
      _
    $region39: #{tpu_custom_call.1} parent=1 // pred_check_branch
      %346 = sbr.rel (0) target = $region41
    $region40: #{tpu_custom_call.1} parent=1 // pred_region
      %347 = dma.done [#allocation4], 256
    $region41: #{tpu_custom_call.1} parent=1 // pred_fallthru
      _
    %348 = vsyncpa [#allocation3], 1
    %349 = vsyncpa [#allocation6], 1
    %350 = vsyncpa [#allocation4], 1

</llo_original>
